<compile_context>
chip_gen: v7x
topology: tpu7x:2x2x1
jax: 0.10.0
libtpu: 0.0.40
codegen_flags: <defaults>
</compile_context>

<pallas_src>
import jax
import jax.numpy as jnp
from jax.experimental import pallas as pl
from jax.experimental.pallas import tpu as pltpu

_LANES = 128
_INT8_SUBLANES = 32                       # int8 native tile is (32, 128)
_ALIGN_ELEMS = _INT8_SUBLANES * _LANES    # 4096: keeps rows int8-tile aligned
_MAX_BLOCK_ROWS = 2048                    # (2048, 128) f32 = 1 MiB per buffer
_MIN_PALLAS_N = _ALIGN_ELEMS              # below this, plain jnp beats launch cost


def _round_up(a, b):
    return -(-a // b) * b


def _binary_relapse_kernel(cutoff_ref, months_ref, event_ref, out_ref):
    # cutoff_ref: SMEM f32[1]   (runtime scalar -> zero recompiles per cutoff)
    # months_ref: VMEM f32[block_rows, 128]
    # event_ref : VMEM f32[block_rows, 128]
    # out_ref   : VMEM i8/i32[block_rows, 128]
    cutoff = cutoff_ref[0]
    cond = jnp.logical_and(months_ref[...] < cutoff,
                           event_ref[...] == jnp.float32(1.0))
    out_ref[...] = cond.astype(out_ref.dtype)


def _batched_call(months_2d, event_2d, cutoff_arr, block_rows, out_dtype):
    rows = months_2d.shape[0]
    num_blocks = pl.cdiv(rows, block_rows)
    return pl.pallas_call(
        _binary_relapse_kernel,
        out_shape=jax.ShapeDtypeStruct((rows, _LANES), out_dtype),
        grid=(num_blocks,),
        in_specs=[
            pl.BlockSpec(memory_space=pltpu.MemorySpace.SMEM),   # cutoff (whole (1,))
            pl.BlockSpec((block_rows, _LANES), lambda i: (i, 0)),  # months
            pl.BlockSpec((block_rows, _LANES), lambda i: (i, 0)),  # event
        ],
        out_specs=pl.BlockSpec((block_rows, _LANES), lambda i: (i, 0)),
        compiler_params=pltpu.CompilerParams(
            dimension_semantics=("parallel",)),
    )(cutoff_arr, months_2d, event_2d)


def to_binary_relapse_label_batch(months, event, cutoff_months, *,
                                  out_dtype=jnp.int8):
    """Vectorized ToBinaryRelapseLabel over N samples.

    months: f32[N] time-to-event in months.
    event:  f32[N] relapse flag (0.0 / 1.0).
    cutoff_months: python float or scalar array (runtime value).
    out_dtype: label dtype (default int8 to minimize HBM writeback; pass
               jnp.int32 if the downstream consumer requires it).
    Returns out_dtype[N] binary labels.
    """
    months = jnp.asarray(months, jnp.float32)
    event = jnp.asarray(event, jnp.float32)
    cutoff = jnp.float32(cutoff_months)
    n = months.shape[0]

    # Tiny batches: launch + tile-pad + DMA dominate; let XLA fuse it inline.
    if n < _MIN_PALLAS_N:
        return ((months < cutoff) & (event == 1.0)).astype(out_dtype)

    if n % _ALIGN_ELEMS == 0:
        # Fast path: layout-compatible reshape, no copies.
        n_pad = n
        months_2d = months.reshape(-1, _LANES)
        event_2d = event.reshape(-1, _LANES)
    else:
        # Ragged tail: pad only to the next 4096-element boundary (< one int8
        # tile row-group), not to a multiple of the block size.
        n_pad = _round_up(n, _ALIGN_ELEMS)
        pad = n_pad - n
        months_2d = jnp.pad(months, (0, pad)).reshape(-1, _LANES)
        event_2d = jnp.pad(event, (0, pad)).reshape(-1, _LANES)

    rows = n_pad // _LANES                      # multiple of 32
    block_rows = min(_MAX_BLOCK_ROWS, rows)
    # Keep >= 2 grid steps when there is enough work so both v7x TensorCores
    # issue DMA (memory-bound -> HBM saturation, not a compute 2x).
    if rows >= 2 * _INT8_SUBLANES and pl.cdiv(rows, block_rows) < 2:
        block_rows = _round_up(pl.cdiv(rows, 2), _INT8_SUBLANES)

    cutoff_arr = cutoff.reshape(1)
    out = _batched_call(months_2d, event_2d, cutoff_arr, block_rows, out_dtype)
    out = out.reshape(-1)
    if n_pad != n:
        out = out[:n]
    return out


def to_binary_relapse_label(x, cutoff_months):
    """Module-equivalent forward: x = [time_to_event_months, relapse_flag] -> 0/1.

    Single-sample path deliberately bypasses Pallas (pure launch overhead for
    two scalars) and computes the predicate inline.
    """
    x = jnp.asarray(x, jnp.float32)
    cutoff = jnp.float32(cutoff_months)
    return jnp.logical_and(x[0] < cutoff, x[1] == jnp.float32(1.0)).astype(jnp.int32)


if __name__ == "__main__":
    cutoff_months = 24.0  # module __init__ parameter

    key = jax.random.PRNGKey(0)
    k_m, k_e, k_mb, k_eb, k_ml, k_el = jax.random.split(key, 6)

    def ref_labels(m, e, dtype):
        return ((m < cutoff_months) & (e == 1.0)).astype(dtype)

    # --- Single-sample forward (exactly the PyTorch module's interface). ---
    months = jax.random.uniform(k_m, (), minval=0.0, maxval=60.0)
    event = jax.random.bernoulli(k_e, p=0.5).astype(jnp.float32)
    x = jnp.stack([months, event]).astype(jnp.float32)
    label = jax.block_until_ready(to_binary_relapse_label(x, cutoff_months))
    ref = 1 if (float(x[0]) < cutoff_months and float(x[1]) == 1.0) else 0
    assert int(label) == ref, f"single-sample mismatch: {int(label)} vs {ref}"

    # --- Tiny batch (plain-jnp bypass path). ---
    n_small = 16
    m_s = jax.random.uniform(k_mb, (n_small,), minval=0.0, maxval=60.0)
    e_s = jax.random.bernoulli(k_eb, p=0.5, shape=(n_small,)).astype(jnp.float32)
    out_s = jax.block_until_ready(
        to_binary_relapse_label_batch(m_s, e_s, cutoff_months))
    assert jnp.array_equal(out_s, ref_labels(m_s, e_s, jnp.int8)), "tiny-batch mismatch"

    # --- Pallas path, aligned (n % 4096 == 0, free reshape, int8 output). ---
    n_aligned = 8192
    m_a = jax.random.uniform(k_ml, (n_aligned,), minval=0.0, maxval=60.0)
    e_a = jax.random.bernoulli(k_el, p=0.5, shape=(n_aligned,)).astype(jnp.float32)
    out_a = jax.block_until_ready(
        to_binary_relapse_label_batch(m_a, e_a, cutoff_months))
    assert out_a.dtype == jnp.int8
    assert jnp.array_equal(out_a, ref_labels(m_a, e_a, jnp.int8)), "aligned mismatch"

    # --- Pallas path, ragged tail + partial last grid block + int32 output. ---
    n_ragged = 5000
    out_r = jax.block_until_ready(
        to_binary_relapse_label_batch(m_a[:n_ragged], e_a[:n_ragged],
                                      cutoff_months, out_dtype=jnp.int32))
    assert out_r.dtype == jnp.int32
    assert jnp.array_equal(out_r, ref_labels(m_a[:n_ragged], e_a[:n_ragged],
                                             jnp.int32)), "ragged mismatch"

    print("KERNEL_OK")
</pallas_src>

<mosaic_0001>
module attributes {stable_mosaic.version = 11 : i64} {
  func.func @_binary_relapse_kernel(%arg0: i32, %arg1: memref<1xf32, #tpu.memory_space<smem>>, %arg2: memref<32x128xf32, #tpu.memory_space<vmem>>, %arg3: memref<32x128xf32, #tpu.memory_space<vmem>>, %arg4: memref<32x128xi8, #tpu.memory_space<vmem>>) attributes {dimension_semantics = [#tpu.dimension_semantics<parallel>], iteration_bounds = array<i64: 2>, scalar_prefetch = 0 : i64, scratch_operands = 0 : i64, tpu.core_type = #tpu.core_type<tc>, window_params = [{transform_indices = @transform_0, window_bounds = array<i64: 1>}, {transform_indices = @transform_1, window_bounds = array<i64: 32, 128>}, {transform_indices = @transform_2, window_bounds = array<i64: 32, 128>}, {transform_indices = @transform_3, window_bounds = array<i64: 32, 128>}]} {
    %c0 = arith.constant 0 : index
    %0 = memref.load %arg1[%c0] : memref<1xf32, #tpu.memory_space<smem>>
    %c0_0 = arith.constant 0 : index
    %c0_1 = arith.constant 0 : index
    %1 = vector.load %arg2[%c0_0, %c0_1] : memref<32x128xf32, #tpu.memory_space<vmem>>, vector<32x128xf32>
    %2 = vector.broadcast %0 : f32 to vector<32x128xf32>
    %3 = arith.cmpf olt, %1, %2 : vector<32x128xf32>
    %c0_2 = arith.constant 0 : index
    %c0_3 = arith.constant 0 : index
    %4 = vector.load %arg3[%c0_2, %c0_3] : memref<32x128xf32, #tpu.memory_space<vmem>>, vector<32x128xf32>
    %cst = arith.constant 1.000000e+00 : f32
    %5 = vector.broadcast %cst : f32 to vector<32x128xf32>
    %6 = arith.cmpf oeq, %4, %5 : vector<32x128xf32>
    %7 = arith.andi %3, %6 : vector<32x128xi1>
    %8 = arith.extui %7 : vector<32x128xi1> to vector<32x128xi8>
    %c0_4 = arith.constant 0 : index
    %c0_5 = arith.constant 0 : index
    %9 = vector.load %arg4[%c0_4, %c0_5] : memref<32x128xi8, #tpu.memory_space<vmem>>, vector<32x128xi8>
    tpu.vector_store %arg4[%c0_4, %c0_5], %8 {strides = array<i32>} : memref<32x128xi8, #tpu.memory_space<vmem>>, vector<32x128xi8>,
    return
  }
  func.func @transform_0(%arg0: i32) -> i32 {
    %c0_i32 = arith.constant 0 : i32
    %c0_i32_0 = arith.constant 0 : i32
    return %c0_i32 : i32
  }
  func.func @transform_1(%arg0: i32) -> (i32, i32) {
    %c0_i32 = arith.constant 0 : i32
    %c0_i32_0 = arith.constant 0 : i32
    return %arg0, %c0_i32 : i32, i32
  }
  func.func @transform_2(%arg0: i32) -> (i32, i32) {
    %c0_i32 = arith.constant 0 : i32
    %c0_i32_0 = arith.constant 0 : i32
    return %arg0, %c0_i32 : i32, i32
  }
  func.func @transform_3(%arg0: i32) -> (i32, i32) {
    %c0_i32 = arith.constant 0 : i32
    %c0_i32_0 = arith.constant 0 : i32
    return %arg0, %c0_i32 : i32, i32
  }
}

</mosaic_0001>

<llo_original>
// kernel: tpu_custom_call.1
$region0: #{tpu_custom_call.1}
  #allocation0 [shape = 'u32[]', space=smem, size = 0x4, offset = 0x4, fixed_abs, tag = 'smem constant byte address 0x4 - core index']
  #allocation1 [shape = 'u32[144,128]{1,0:T(1,128)}', space=vmem, size = 0x12000, scoped, tag = 'internal scratch']
  #allocation2 [shape = 'f32[1]{0:T(128)S(6)}', space=smem, size = 0x200, scoped, tag = 'scoped memory for tpu_custom_call.1']
  %s0 = inlined_call_operand.<no memory space> [shape: f32[1], index: 0, kind: input, shape index: {}]
  %s1 = inlined_call_operand.hbm [shape: f32[64,128], index: 1, kind: input, shape index: {}]
  %s2 = inlined_call_operand.hbm [shape: f32[64,128], index: 2, kind: input, shape index: {}]
  %s3 = inlined_call_operand.hbm [shape: s8[64,128], index: 3, kind: output, shape index: {}]
  %s4 = sld [smem:[#allocation0]]
  $region53: #{tpu_custom_call.1} parent=0
    _
  %s6 = ssub.s32 1, %s4
  %s7 = scalar_select 0, %s6, %s4
  %8 = sst [smem:[#allocation2]] %s0
  $region1: #{tpu_custom_call.1} parent=0
    #allocation3 [shape = 'u8[32768]{0}', space=vmem, size = 0x8000, scoped, tag = 'input window, operand 1']
    #allocation4 [shape = 's32[2]{0}', space=sflag, size = 0x8, scoped, tag = 'scoped memory for tpu_custom_call.1']
    #allocation5 [shape = 's32[2]{0}', space=sflag, size = 0x8, scoped, tag = 'scoped memory for tpu_custom_call.1']
    #allocation6 [shape = 'u8[32768]{0}', space=vmem, size = 0x8000, scoped, tag = 'input window, operand 2']
    #allocation7 [shape = 's32[2]{0}', space=sflag, size = 0x8, scoped, tag = 'scoped memory for tpu_custom_call.1']
    #allocation8 [shape = 'u8[8192]{0}', space=vmem, size = 0x2000, scoped, tag = 'output window, operand 0']
    %9 = vsyncpa [#allocation4], 0
    %s10 = scalar_lea.sflag [#allocation4], 1
    %11 = vsyncpa %s10, 0
    %12 = vsyncpa [#allocation7], 0
    %s13 = scalar_lea.sflag [#allocation7], 1
    %14 = vsyncpa %s13, 0
    %15 = vsyncpa [#allocation5], 0
    %s16 = scalar_lea.sflag [#allocation5], 1
    %17 = vsyncpa %s16, 0
    loop: start=0, step=1, limit=4
    $region2: #{tpu_custom_call.1} parent=1 // loop_pre_header
      _
    $region3: #{tpu_custom_call.1} parent=1 // loop_header
      %s19 = sphi 0, %s23
      %p20 = scmp.ge.s32.totalorder %s19, 4
      %s27 = sphi 0, %s27
      %s29 = sphi 0, %s27
      %s30 = sphi 0, %s29
      %s44 = sphi 0, %s30
      %s50 = sphi 0, %s52
      %s53 = sphi 0, %s50
      %s54 = sphi 0, %s53
      %s70 = sphi 0, %s54
      %s76 = sphi 0, %s78
      %s79 = sphi 0, %s76
      %s80 = sphi 0, %s79
      %s96 = sphi 0, %s80
      %s102 = sphi 0, %s104
      %s105 = sphi 0, %s102
      %s106 = sphi 0, %s105
      %s122 = sphi 0, %s106
    $region4: #{tpu_custom_call.1} parent=1 // loop_header_branch
      %22 = sbr.rel (%p20) target = $region8
    $region5: #{tpu_custom_call.1} parent=1 // loop_body
      %s24 = ssub.s32 %s19, 1
      %s25 = ssub.s32 %s19, 2
      %s26 = sadd.s32 %s19, 1
      %s28 = sadd.s32 %s27, 1
      %p31 = scmp.eq.s32.totalorder %s19, 1
      %p32 = scmp.ne.s32.totalorder %s27, %s29
      %p33 = scmp.eq.s32.totalorder %s19, 0
      %p34 = por %p32, %p33
      %p35 = scmp.ne.s32.totalorder %s27, %s29
      %p36 = scmp.eq.s32.totalorder %s24, 1
      %p37 = por %p35, %p36
      %p38 = scmp.ne.s32.totalorder %s29, %s30
      %p39 = scmp.eq.s32.totalorder %s24, 0
      %p40 = por %p38, %p39
      %p41 = scmp.ne.s32.totalorder %s29, %s30
      %p42 = scmp.eq.s32.totalorder %s25, 1
      %p43 = por %p41, %p42
      %p45 = scmp.ne.s32.totalorder %s30, %s44
      %p46 = scmp.eq.s32.totalorder %s25, 0
      %p47 = por %p45, %p46
      %s48 = ssub.s32 %s19, %s26
      %p49 = scmp.eq.s32.totalorder %s48, 0
      %s51 = sadd.s32 %s50, 1
      %s52 = scalar_select %p49, %s50, %s51
      %p55 = pneg %p49
      %p56 = scmp.eq.s32.totalorder %s19, 1
      %p57 = por %p55, %p56
      %p58 = scmp.ne.s32.totalorder %s50, %s53
      %p59 = scmp.eq.s32.totalorder %s19, 0
      %p60 = por %p58, %p59
      %p61 = scmp.ne.s32.totalorder %s50, %s53
      %p62 = scmp.eq.s32.totalorder %s24, 1
      %p63 = por %p61, %p62
      %p64 = scmp.ne.s32.totalorder %s53, %s54
      %p65 = scmp.eq.s32.totalorder %s24, 0
      %p66 = por %p64, %p65
      %p67 = scmp.ne.s32.totalorder %s53, %s54
      %p68 = scmp.eq.s32.totalorder %s25, 1
      %p69 = por %p67, %p68
      %p71 = scmp.ne.s32.totalorder %s54, %s70
      %p72 = scmp.eq.s32.totalorder %s25, 0
      %p73 = por %p71, %p72
      %s74 = ssub.s32 %s19, %s26
      %p75 = scmp.eq.s32.totalorder %s74, 0
      %s77 = sadd.s32 %s76, 1
      %s78 = scalar_select %p75, %s76, %s77
      %p81 = pneg %p75
      %p82 = scmp.eq.s32.totalorder %s19, 1
      %p83 = por %p81, %p82
      %p84 = scmp.ne.s32.totalorder %s76, %s79
      %p85 = scmp.eq.s32.totalorder %s19, 0
      %p86 = por %p84, %p85
      %p87 = scmp.ne.s32.totalorder %s76, %s79
      %p88 = scmp.eq.s32.totalorder %s24, 1
      %p89 = por %p87, %p88
      %p90 = scmp.ne.s32.totalorder %s79, %s80
      %p91 = scmp.eq.s32.totalorder %s24, 0
      %p92 = por %p90, %p91
      %p93 = scmp.ne.s32.totalorder %s79, %s80
      %p94 = scmp.eq.s32.totalorder %s25, 1
      %p95 = por %p93, %p94
      %p97 = scmp.ne.s32.totalorder %s80, %s96
      %p98 = scmp.eq.s32.totalorder %s25, 0
      %p99 = por %p97, %p98
      %s100 = ssub.s32 %s19, %s26
      %p101 = scmp.eq.s32.totalorder %s100, 0
      %s103 = sadd.s32 %s102, 1
      %s104 = scalar_select %p101, %s102, %s103
      %p107 = pneg %p101
      %p108 = scmp.eq.s32.totalorder %s19, 1
      %p109 = por %p107, %p108
      %p110 = scmp.ne.s32.totalorder %s102, %s105
      %p111 = scmp.eq.s32.totalorder %s19, 0
      %p112 = por %p110, %p111
      %p113 = scmp.ne.s32.totalorder %s102, %s105
      %p114 = scmp.eq.s32.totalorder %s24, 1
      %p115 = por %p113, %p114
      %p116 = scmp.ne.s32.totalorder %s105, %s106
      %p117 = scmp.eq.s32.totalorder %s24, 0
      %p118 = por %p116, %p117
      %p119 = scmp.ne.s32.totalorder %s105, %s106
      %p120 = scmp.eq.s32.totalorder %s25, 1
      %p121 = por %p119, %p120
      %p123 = scmp.ne.s32.totalorder %s106, %s122
      %p124 = scmp.eq.s32.totalorder %s25, 0
      %p125 = por %p123, %p124
      %p126 = scmp.le.s32.totalorder 1, %s19
      %p127 = scmp.lt.s32.totalorder %s19, 3
      %p128 = pnand %p126, %p127
      %p129 = pneg %p128
      // Predicated region
      $region9: #{tpu_custom_call.1} parent=5 // pred_check
        _
      $region10: #{tpu_custom_call.1} parent=5 // pred_check_branch
        %131 = sbr.rel (%p128) target = $region12
      $region11: #{tpu_custom_call.1} parent=5 // pred_region
        %s132 = ssub.s32 %s19, 1
        // Predicated region
        $region13: #{tpu_custom_call.1} parent=11 // pred_check
          %p133 = pneg %p40
        $region14: #{tpu_custom_call.1} parent=11 // pred_check_branch
          %135 = sbr.rel (%p133) target = $region16
        $region15: #{tpu_custom_call.1} parent=11 // pred_region
          _
        $region16: #{tpu_custom_call.1} parent=11 // pred_fallthru
          _
      $region12: #{tpu_custom_call.1} parent=5 // pred_fallthru
        _
      %p136 = scmp.lt.s32.totalorder %s19, 2
      // Predicated region
      $region17: #{tpu_custom_call.1} parent=5 // pred_check
        %p137 = pneg %p136
      $region18: #{tpu_custom_call.1} parent=5 // pred_check_branch
        %139 = sbr.rel (%p137) target = $region20
      $region19: #{tpu_custom_call.1} parent=5 // pred_region
        // Predicated region
        $region21: #{tpu_custom_call.1} parent=19 // pred_check
          %p140 = pneg %p60
        $region22: #{tpu_custom_call.1} parent=19 // pred_check_branch
          %142 = sbr.rel (%p140) target = $region24
        $region23: #{tpu_custom_call.1} parent=19 // pred_region
          %s143 = sand.u32 %s50, 1
          %s144 = scalar_lea.sflag [#allocation4], %s143
          %s145 = sand.u32 %s50, 1
          %s146 = smul.addr %s145, 32
          %s147 = scalar_lea.vmem [#allocation3], %s146
          %s148 = smul.u32 4, %s19
          %s150 = ssub.s32 512, 512
          %151 = vsyncadd %s144, %s150
          %s152 = smul.addr %s148, 128
          %s153 = scalar_lea.hbm %s1, %s152
          %s154 = sshll.u32 %s147, 4
          %s155 = int_to_ptr.vmem [resolvable:$true] %s154
          %160 = dma.hbm_to_vmem [thread:$0]  %s153, 512, %s155, %s144, 128, 128, 8
        $region24: #{tpu_custom_call.1} parent=19 // pred_fallthru
          _
        // Predicated region
        $region25: #{tpu_custom_call.1} parent=19 // pred_check
          %p161 = pneg %p86
        $region26: #{tpu_custom_call.1} parent=19 // pred_check_branch
          %163 = sbr.rel (%p161) target = $region28
        $region27: #{tpu_custom_call.1} parent=19 // pred_region
          %s164 = sand.u32 %s76, 1
          %s165 = scalar_lea.sflag [#allocation7], %s164
          %s166 = sand.u32 %s76, 1
          %s167 = smul.addr %s166, 32
          %s168 = scalar_lea.vmem [#allocation6], %s167
          %s169 = smul.u32 4, %s19
          %s171 = ssub.s32 512, 512
          %172 = vsyncadd %s165, %s171
          %s173 = smul.addr %s169, 128
          %s174 = scalar_lea.hbm %s2, %s173
          %s175 = sshll.u32 %s168, 4
          %s176 = int_to_ptr.vmem [resolvable:$true] %s175
          %181 = dma.hbm_to_vmem [thread:$0]  %s174, 512, %s176, %s165, 128, 128, 8
        $region28: #{tpu_custom_call.1} parent=19 // pred_fallthru
          _
      $region20: #{tpu_custom_call.1} parent=5 // pred_fallthru
        _
      %p182 = scmp.le.s32.totalorder 1, %s19
      %p183 = scmp.lt.s32.totalorder %s19, 3
      %p184 = pnand %p182, %p183
      %p185 = pneg %p184
      // Predicated region
      $region29: #{tpu_custom_call.1} parent=5 // pred_check
        _
      $region30: #{tpu_custom_call.1} parent=5 // pred_check_branch
        %187 = sbr.rel (%p184) target = $region32
      $region31: #{tpu_custom_call.1} parent=5 // pred_region
        %s188 = ssub.s32 %s19, 1
        %s189 = sand.u32 %s53, 1
        %s190 = scalar_lea.sflag [#allocation4], %s189
        %s191 = sand.u32 %s53, 1
        %s192 = smul.addr %s191, 32
        %s193 = scalar_lea.vmem [#allocation3], %s192
        // Predicated region
        $region33: #{tpu_custom_call.1} parent=31 // pred_check
          %p194 = pneg %p66
        $region34: #{tpu_custom_call.1} parent=31 // pred_check_branch
          %196 = sbr.rel (%p194) target = $region36
        $region35: #{tpu_custom_call.1} parent=31 // pred_region
          %197 = dma.done %s190, 512
        $region36: #{tpu_custom_call.1} parent=31 // pred_fallthru
          _
        %s198 = sand.u32 %s79, 1
        %s199 = scalar_lea.sflag [#allocation7], %s198
        %s200 = sand.u32 %s79, 1
        %s201 = smul.addr %s200, 32
        %s202 = scalar_lea.vmem [#allocation6], %s201
        // Predicated region
        $region37: #{tpu_custom_call.1} parent=31 // pred_check
          %p203 = pneg %p92
        $region38: #{tpu_custom_call.1} parent=31 // pred_check_branch
          %205 = sbr.rel (%p203) target = $region40
        $region39: #{tpu_custom_call.1} parent=31 // pred_region
          %206 = dma.done %s199, 512
        $region40: #{tpu_custom_call.1} parent=31 // pred_fallthru
          _
        %p207 = pneg %p40
        %p208 = pneg %p37
        %s209 = sand.u32 %s53, 1
        %s210 = scalar_lea.sflag [#allocation4], %s209
        %s211 = sand.u32 %s53, 1
        %s212 = smul.addr %s211, 32
        %s213 = scalar_lea.vmem [#allocation3], %s212
        %p214 = pneg %p66
        %p215 = pneg %p63
        %s216 = sand.u32 %s79, 1
        %s217 = scalar_lea.sflag [#allocation7], %s216
        %s218 = sand.u32 %s79, 1
        %s219 = smul.addr %s218, 32
        %s220 = scalar_lea.vmem [#allocation6], %s219
        %p221 = pneg %p92
        %p222 = pneg %p89
        %p223 = pneg %p118
        %p224 = pneg %p115
        %s225 = sand.u32 %s105, 1
        %s226 = scalar_lea.sflag [#allocation5], %s225
        %s227 = sand.u32 %s105, 1
        %s228 = smul.addr %s227, 8
        %s229 = scalar_lea.vmem [#allocation8], %s228
        %s230 = smul.u32 4, %s24
        %s231 = smul.u32 4, %s24
        %s234 = sld [smem:[#allocation2]]
        %v235 = vld [vmem:[%s193] sm:$0xff]
        %v236 = vld [vmem:[%s193 + $0x8] sm:$0xff]
        %v237 = vld [vmem:[%s193 + $0x10] sm:$0xff]
        %v238 = vld [vmem:[%s193 + $0x18] sm:$0xff]
        %v239 = vstv %s234
        %vm240 = vcmp.lt.f32.partialorder %v235, %v239
        %vm241 = vcmp.lt.f32.partialorder %v236, %v239
        %vm242 = vcmp.lt.f32.partialorder %v237, %v239
        %vm243 = vcmp.lt.f32.partialorder %v238, %v239
        %v244 = vld [vmem:[%s202] sm:$0xff]
        %v245 = vld [vmem:[%s202 + $0x8] sm:$0xff]
        %v246 = vld [vmem:[%s202 + $0x10] sm:$0xff]
        %v247 = vld [vmem:[%s202 + $0x18] sm:$0xff]
        %vm248 = vcmp.eq.f32.partialorder %v244, 1.0
        %vm249 = vcmp.eq.f32.partialorder %v245, 1.0
        %vm250 = vcmp.eq.f32.partialorder %v246, 1.0
        %vm251 = vcmp.eq.f32.partialorder %v247, 1.0
        %vm252 = vmand %vm240, %vm248
        %vm253 = vmand %vm241, %vm249
        %vm254 = vmand %vm242, %vm250
        %vm255 = vmand %vm243, %vm251
        %vm256 = vmpackc.low %vm253, %vm252
        %vm257 = vmpackc.low %vm255, %vm254
        %vm258 = vmpackc.even %vm257, %vm256
        %v259 = vsel %vm258, 16843009, 0
        %260 = vst [vmem:[%s229] sm:$0xff] %v259
        %s261 = sand.u32 %s105, 1
        %s262 = scalar_lea.sflag [#allocation5], %s261
        %s263 = sand.u32 %s105, 1
        %s264 = smul.addr %s263, 8
        %s265 = scalar_lea.vmem [#allocation8], %s264
        // Predicated region
        $region41: #{tpu_custom_call.1} parent=31 // pred_check
          %p266 = pneg %p115
        $region42: #{tpu_custom_call.1} parent=31 // pred_check_branch
          %268 = sbr.rel (%p266) target = $region44
        $region43: #{tpu_custom_call.1} parent=31 // pred_region
          %s270 = ssub.s32 128, 128
          %271 = vsyncadd %s262, %s270
          %s272 = smul.addr %s24, 128
          %s273 = scalar_lea.hbm %s3, %s272
          %s275 = sshll.u32 %s265, 4
          %s276 = int_to_ptr.vmem [resolvable:$true] %s275
          %278 = dma.vmem_to_hbm [thread:$0]  %s276, 128, %s273, %s262
        $region44: #{tpu_custom_call.1} parent=31 // pred_fallthru
          _
      $region32: #{tpu_custom_call.1} parent=5 // pred_fallthru
        _
      %p279 = scmp.le.s32.totalorder 2, %s19
      // Predicated region
      $region45: #{tpu_custom_call.1} parent=5 // pred_check
        %p280 = pneg %p279
      $region46: #{tpu_custom_call.1} parent=5 // pred_check_branch
        %282 = sbr.rel (%p280) target = $region48
      $region47: #{tpu_custom_call.1} parent=5 // pred_region
        %s283 = ssub.s32 %s19, 2
        // Predicated region
        $region49: #{tpu_custom_call.1} parent=47 // pred_check
          %p284 = pneg %p121
        $region50: #{tpu_custom_call.1} parent=47 // pred_check_branch
          %286 = sbr.rel (%p284) target = $region52
        $region51: #{tpu_custom_call.1} parent=47 // pred_region
          %s287 = sand.u32 %s106, 1
          %s288 = scalar_lea.sflag [#allocation5], %s287
          %s289 = sand.u32 %s106, 1
          %s290 = smul.addr %s289, 8
          %s291 = scalar_lea.vmem [#allocation8], %s290
          %292 = dma.done %s288, 128
        $region52: #{tpu_custom_call.1} parent=47 // pred_fallthru
          _
      $region48: #{tpu_custom_call.1} parent=5 // pred_fallthru
        _
    $region6: #{tpu_custom_call.1} parent=1 // loop_footer
      %s23 = sadd.s32 1, %s19
    $region7: #{tpu_custom_call.1} parent=1 // loop_footer_branch
      %18 = sbr.rel target = $region3
    $region8: #{tpu_custom_call.1} parent=1 // loop_exit
      _
    %293 = vsyncpa [#allocation4], 1
    %s294 = scalar_lea.sflag [#allocation4], 1
    %295 = vsyncpa %s294, 1
    %296 = vsyncpa [#allocation7], 1
    %s297 = scalar_lea.sflag [#allocation7], 1
    %298 = vsyncpa %s297, 1
    %299 = vsyncpa [#allocation5], 1
    %s300 = scalar_lea.sflag [#allocation5], 1
    %301 = vsyncpa %s300, 1

</llo_original>
